<compile_context>
chip_gen: v7x
topology: tpu7x:2x2x1
jax: 0.10.0
libtpu: 0.0.40
codegen_flags: <defaults>
</compile_context>

<pallas_src>
import math

import jax
import jax.numpy as jnp
from jax.experimental import pallas as pl
from jax.experimental.pallas import tpu as pltpu


def _conv_cols(x, w):
    """x: (Cin, T), w: (C4, Cin) -> y: (C4, T) via unrolled broadcast-FMA (VPU)."""
    cin = x.shape[0]
    y = w[:, 0:1] * x[0:1, :]
    for ci in range(1, cin):
        y = y + w[:, ci:ci + 1] * x[ci:ci + 1, :]
    return y


def _stats_kernel(x_ref, w_ref, sum_ref, ssq_ref):
    """Per-batch accumulation of sum / sum-of-squares of y = w @ x over pixels."""
    t = pl.program_id(1)

    @pl.when(t == 0)
    def _():
        sum_ref[...] = jnp.zeros_like(sum_ref)
        ssq_ref[...] = jnp.zeros_like(ssq_ref)

    y = _conv_cols(x_ref[0], w_ref[...])                       # (C4, T) f32
    sum_ref[...] += jnp.sum(y, axis=1, keepdims=True)[None]
    ssq_ref[...] += jnp.sum(y * y, axis=1, keepdims=True)[None]


def _apply_kernel(x_ref, w_ref, mean_ref, inv_ref, o_ref):
    """Recompute y = w @ x, normalize with (mean, invstd), ReLU, store."""
    y = _conv_cols(x_ref[0], w_ref[...])                       # (C4, T) f32
    z = (y - mean_ref[...]) * inv_ref[...]
    o_ref[0] = jnp.maximum(z, 0.0)


def _pick_tile(hwp, cin, c4, t_max, vmem_budget):
    """Largest multiple-of-128 divisor of hwp that fits the VMEM budget."""
    bytes_per_pix = (cin + c4) * 4 * 2          # x-block + out-block, double-buffered
    t_cap = max(128, min(t_max, vmem_budget // bytes_per_pix))
    best = 128
    for cand in range(hwp // 128, 0, -1):
        t = cand * 128
        if hwp % t == 0 and t <= t_cap:
            best = t
            break
    return best


def trans_conv_bn_relu(x, weight, eps=1e-5, t_max=8192, vmem_budget=24 << 20):
    """x: [N, Cin, H, W] (NCHW).  weight: [Cin, Cout, 2, 2] (PyTorch layout)."""
    N, Cin, H, W = x.shape
    Cin_w, Cout, kH, kW = weight.shape
    assert Cin == Cin_w and kH == 2 and kW == 2
    C4 = kH * kW * Cout
    HW = H * W

    # channels-first pixel-flat view (free reshape; no transpose of x)
    x_cf = x.reshape(N, Cin, HW).astype(jnp.float32)
    HWp = ((HW + 127) // 128) * 128
    if HWp != HW:
        # zero pixels contribute 0 to BN sums; their outputs get sliced off
        x_cf = jnp.pad(x_cf, ((0, 0), (0, 0), (0, HWp - HW)))

    # weight rows ordered c4 = co*4 + kh*2 + kw
    w_cf = jnp.transpose(weight, (1, 2, 3, 0)).reshape(C4, Cin).astype(jnp.float32)

    T = _pick_tile(HWp, Cin, C4, t_max, vmem_budget)
    nT = HWp // T

    # ---- pass 1: BatchNorm statistics (reads x once; no y round-trip to HBM) ----
    col_sum, col_ssq = pl.pallas_call(
        _stats_kernel,
        out_shape=(
            jax.ShapeDtypeStruct((N, C4, 1), jnp.float32),
            jax.ShapeDtypeStruct((N, C4, 1), jnp.float32),
        ),
        grid_spec=pltpu.PrefetchScalarGridSpec(
            num_scalar_prefetch=0,
            grid=(N, nT),
            in_specs=[
                pl.BlockSpec((1, Cin, T), lambda n, t: (n, 0, t)),
                pl.BlockSpec((C4, Cin), lambda n, t: (0, 0)),
            ],
            out_specs=[
                pl.BlockSpec((1, C4, 1), lambda n, t: (n, 0, 0)),   # per-batch partial
                pl.BlockSpec((1, C4, 1), lambda n, t: (n, 0, 0)),   # per-batch partial
            ],
        ),
        compiler_params=pltpu.CompilerParams(
            dimension_semantics=("parallel", "arbitrary")),
    )(x_cf, w_cf)

    # ---- tiny scalar glue: per-output-channel mean / invstd (training-mode BN) ----
    count = float(N * HW * kH * kW)
    c4_sum = jnp.sum(col_sum[:, :, 0], axis=0)                 # (C4,)
    c4_ssq = jnp.sum(col_ssq[:, :, 0], axis=0)
    ch_sum = c4_sum.reshape(Cout, kH * kW).sum(axis=1)
    ch_ssq = c4_ssq.reshape(Cout, kH * kW).sum(axis=1)
    mean = ch_sum / count
    var = ch_ssq / count - mean * mean                         # biased var (BN training)
    invstd = jax.lax.rsqrt(var + eps)
    # bn.weight == 1, bn.bias == 0 (as set in __init__) -> pure normalize
    mean_cf = jnp.repeat(mean, kH * kW).reshape(C4, 1)
    inv_cf = jnp.repeat(invstd, kH * kW).reshape(C4, 1)

    # ---- pass 2: recompute conv, normalize, ReLU, write the activation once ----
    z_cf = pl.pallas_call(
        _apply_kernel,
        out_shape=jax.ShapeDtypeStruct((N, C4, HWp), jnp.float32),
        grid_spec=pltpu.PrefetchScalarGridSpec(
            num_scalar_prefetch=0,
            grid=(N, nT),
            in_specs=[
                pl.BlockSpec((1, Cin, T), lambda n, t: (n, 0, t)),
                pl.BlockSpec((C4, Cin), lambda n, t: (0, 0)),
                pl.BlockSpec((C4, 1), lambda n, t: (0, 0)),
                pl.BlockSpec((C4, 1), lambda n, t: (0, 0)),
            ],
            out_specs=pl.BlockSpec((1, C4, T), lambda n, t: (n, 0, t)),
        ),
        compiler_params=pltpu.CompilerParams(
            dimension_semantics=("parallel", "parallel")),
    )(x_cf, w_cf, mean_cf, inv_cf)

    # pixel-shuffle back to the stride-2 upsampled NCHW image.
    # TODO(synk): fold this interleave into the kernel out_spec for large W; at
    # small W the lane dim of a direct NCHW write (2W) would be lane-sparse, so
    # the XLA transpose is kept here.
    z = z_cf[:, :, :HW].reshape(N, Cout, kH, kW, H, W)
    out = jnp.transpose(z, (0, 1, 4, 2, 5, 3)).reshape(N, Cout, H * kH, W * kW)
    return out


def _reference(x, weight, eps=1e-5):
    """Pure-JAX reference of the PyTorch forward pass."""
    N, Cin, H, W = x.shape
    _, Cout, kH, kW = weight.shape
    # ConvTranspose2d, k=2, s=2, p=0, no bias (no overlaps)
    y = jnp.einsum('ncij,cokl->noikjl', x, weight).reshape(N, Cout, H * kH, W * kW)
    # BatchNorm2d (training mode, weight=1, bias=0, biased variance)
    mean = y.mean(axis=(0, 2, 3), keepdims=True)
    var = ((y - mean) ** 2).mean(axis=(0, 2, 3), keepdims=True)
    yhat = (y - mean) / jnp.sqrt(var + eps)
    return jnp.maximum(yhat, 0.0)


if __name__ == "__main__":
    N, Cin, Cout, H, W = 2, 4, 8, 16, 16
    kH = kW = 2

    key = jax.random.PRNGKey(0)
    kx, kw = jax.random.split(key)

    x = jax.random.normal(kx, (N, Cin, H, W), dtype=jnp.float32)

    # Deterministic xavier_uniform_ init for ConvTranspose2d weight [Cin, Cout, 2, 2]
    fan_in = Cout * kH * kW
    fan_out = Cin * kH * kW
    bound = math.sqrt(6.0 / (fan_in + fan_out))
    weight = jax.random.uniform(kw, (Cin, Cout, kH, kW), dtype=jnp.float32,
                                minval=-bound, maxval=bound)

    out = trans_conv_bn_relu(x, weight)
    out = jax.block_until_ready(out)

    ref = _reference(x, weight)
    assert out.shape == (N, Cout, H * 2, W * 2)
    assert jnp.allclose(out, ref, atol=1e-4, rtol=1e-4), "mismatch vs reference"

    print("KERNEL_OK")
</pallas_src>

<mosaic_0001>
module attributes {stable_mosaic.version = 11 : i64} {
  func.func @_stats_kernel(%arg0: i32, %arg1: i32, %arg2: memref<1x4x256xf32, #tpu.memory_space<vmem>>, %arg3: memref<32x4xf32, #tpu.memory_space<vmem>>, %arg4: memref<1x32x1xf32, #tpu.memory_space<vmem>>, %arg5: memref<1x32x1xf32, #tpu.memory_space<vmem>>) attributes {dimension_semantics = [#tpu.dimension_semantics<parallel>, #tpu.dimension_semantics<arbitrary>], iteration_bounds = array<i64: 2, 1>, scalar_prefetch = 0 : i64, scratch_operands = 0 : i64, tpu.core_type = #tpu.core_type<tc>, window_params = [{transform_indices = @transform_0, window_bounds = array<i64: 1, 4, 256>}, {pipeline_mode = #tpu.pipeline_mode<synchronous>, transform_indices = @transform_1, window_bounds = array<i64: 32, 4>}, {transform_indices = @transform_2, window_bounds = array<i64: 1, 32, 1>}, {transform_indices = @transform_3, window_bounds = array<i64: 1, 32, 1>}]} {
    %c0_i32 = arith.constant 0 : i32
    %0 = arith.cmpi eq, %arg1, %c0_i32 : i32
    %1 = arith.extui %0 : i1 to i32
    %c0_i32_0 = arith.constant 0 : i32
    %2 = arith.cmpi ne, %1, %c0_i32_0 : i32
    scf.if %2 {
      %cst_18 = arith.constant 0.000000e+00 : f32
      %42 = vector.broadcast %cst_18 : f32 to vector<1x32x1xf32>
      %c0_19 = arith.constant 0 : index
      %c0_20 = arith.constant 0 : index
      %c0_21 = arith.constant 0 : index
      %43 = vector.load %arg4[%c0_19, %c0_20, %c0_21] : memref<1x32x1xf32, #tpu.memory_space<vmem>>, vector<1x32x1xf32>
      tpu.vector_store %arg4[%c0_19, %c0_20, %c0_21], %42 {strides = array<i32>} : memref<1x32x1xf32, #tpu.memory_space<vmem>>, vector<1x32x1xf32>,
      %cst_22 = arith.constant 0.000000e+00 : f32
      %44 = vector.broadcast %cst_22 : f32 to vector<1x32x1xf32>
      %c0_23 = arith.constant 0 : index
      %c0_24 = arith.constant 0 : index
      %c0_25 = arith.constant 0 : index
      %45 = vector.load %arg5[%c0_23, %c0_24, %c0_25] : memref<1x32x1xf32, #tpu.memory_space<vmem>>, vector<1x32x1xf32>
      tpu.vector_store %arg5[%c0_23, %c0_24, %c0_25], %44 {strides = array<i32>} : memref<1x32x1xf32, #tpu.memory_space<vmem>>, vector<1x32x1xf32>,
    } else {
    }
    %c0 = arith.constant 0 : index
    %c0_1 = arith.constant 0 : index
    %c0_2 = arith.constant 0 : index
    %3 = vector.load %arg2[%c0, %c0_1, %c0_2] : memref<1x4x256xf32, #tpu.memory_space<vmem>>, vector<1x4x256xf32>
    %4 = vector.shape_cast %3 : vector<1x4x256xf32> to vector<4x256xf32>
    %c0_3 = arith.constant 0 : index
    %c0_4 = arith.constant 0 : index
    %5 = vector.load %arg3[%c0_3, %c0_4] : memref<32x4xf32, #tpu.memory_space<vmem>>, vector<32x4xf32>
    %6 = vector.extract_strided_slice %5 {offsets = [0, 0], sizes = [32, 1], strides = [1, 1]} : vector<32x4xf32> to vector<32x1xf32>
    %7 = vector.extract_strided_slice %4 {offsets = [0, 0], sizes = [1, 256], strides = [1, 1]} : vector<4x256xf32> to vector<1x256xf32>
    %8 = vector.broadcast %6 : vector<32x1xf32> to vector<32x256xf32>
    %9 = vector.broadcast %7 : vector<1x256xf32> to vector<32x256xf32>
    %10 = arith.mulf %8, %9 : vector<32x256xf32>
    %11 = vector.extract_strided_slice %5 {offsets = [0, 1], sizes = [32, 1], strides = [1, 1]} : vector<32x4xf32> to vector<32x1xf32>
    %12 = vector.extract_strided_slice %4 {offsets = [1, 0], sizes = [1, 256], strides = [1, 1]} : vector<4x256xf32> to vector<1x256xf32>
    %13 = vector.broadcast %11 : vector<32x1xf32> to vector<32x256xf32>
    %14 = vector.broadcast %12 : vector<1x256xf32> to vector<32x256xf32>
    %15 = arith.mulf %13, %14 : vector<32x256xf32>
    %16 = arith.addf %10, %15 : vector<32x256xf32>
    %17 = vector.extract_strided_slice %5 {offsets = [0, 2], sizes = [32, 1], strides = [1, 1]} : vector<32x4xf32> to vector<32x1xf32>
    %18 = vector.extract_strided_slice %4 {offsets = [2, 0], sizes = [1, 256], strides = [1, 1]} : vector<4x256xf32> to vector<1x256xf32>
    %19 = vector.broadcast %17 : vector<32x1xf32> to vector<32x256xf32>
    %20 = vector.broadcast %18 : vector<1x256xf32> to vector<32x256xf32>
    %21 = arith.mulf %19, %20 : vector<32x256xf32>
    %22 = arith.addf %16, %21 : vector<32x256xf32>
    %23 = vector.extract_strided_slice %5 {offsets = [0, 3], sizes = [32, 1], strides = [1, 1]} : vector<32x4xf32> to vector<32x1xf32>
    %24 = vector.extract_strided_slice %4 {offsets = [3, 0], sizes = [1, 256], strides = [1, 1]} : vector<4x256xf32> to vector<1x256xf32>
    %25 = vector.broadcast %23 : vector<32x1xf32> to vector<32x256xf32>
    %26 = vector.broadcast %24 : vector<1x256xf32> to vector<32x256xf32>
    %27 = arith.mulf %25, %26 : vector<32x256xf32>
    %28 = arith.addf %22, %27 : vector<32x256xf32>
    %c0_5 = arith.constant 0 : index
    %c0_6 = arith.constant 0 : index
    %c0_7 = arith.constant 0 : index
    %29 = vector.load %arg4[%c0_5, %c0_6, %c0_7] : memref<1x32x1xf32, #tpu.memory_space<vmem>>, vector<1x32x1xf32>
    %cst = arith.constant dense<0.000000e+00> : vector<32xf32>
    %30 = vector.multi_reduction <add>, %28, %cst [1] : vector<32x256xf32> to vector<32xf32>
    %31 = vector.shape_cast %30 : vector<32xf32> to vector<32x1xf32>
    %32 = vector.shape_cast %31 : vector<32x1xf32> to vector<1x32x1xf32>
    %33 = arith.addf %29, %32 : vector<1x32x1xf32>
    %c0_8 = arith.constant 0 : index
    %c0_9 = arith.constant 0 : index
    %c0_10 = arith.constant 0 : index
    %34 = vector.load %arg4[%c0_8, %c0_9, %c0_10] : memref<1x32x1xf32, #tpu.memory_space<vmem>>, vector<1x32x1xf32>
    tpu.vector_store %arg4[%c0_8, %c0_9, %c0_10], %33 {strides = array<i32>} : memref<1x32x1xf32, #tpu.memory_space<vmem>>, vector<1x32x1xf32>,
    %c0_11 = arith.constant 0 : index
    %c0_12 = arith.constant 0 : index
    %c0_13 = arith.constant 0 : index
    %35 = vector.load %arg5[%c0_11, %c0_12, %c0_13] : memref<1x32x1xf32, #tpu.memory_space<vmem>>, vector<1x32x1xf32>
    %36 = arith.mulf %28, %28 : vector<32x256xf32>
    %cst_14 = arith.constant dense<0.000000e+00> : vector<32xf32>
    %37 = vector.multi_reduction <add>, %36, %cst_14 [1] : vector<32x256xf32> to vector<32xf32>
    %38 = vector.shape_cast %37 : vector<32xf32> to vector<32x1xf32>
    %39 = vector.shape_cast %38 : vector<32x1xf32> to vector<1x32x1xf32>
    %40 = arith.addf %35, %39 : vector<1x32x1xf32>
    %c0_15 = arith.constant 0 : index
    %c0_16 = arith.constant 0 : index
    %c0_17 = arith.constant 0 : index
    %41 = vector.load %arg5[%c0_15, %c0_16, %c0_17] : memref<1x32x1xf32, #tpu.memory_space<vmem>>, vector<1x32x1xf32>
    tpu.vector_store %arg5[%c0_15, %c0_16, %c0_17], %40 {strides = array<i32>} : memref<1x32x1xf32, #tpu.memory_space<vmem>>, vector<1x32x1xf32>,
    return
  }
  func.func @transform_0(%arg0: i32, %arg1: i32) -> (i32, i32, i32) {
    %c0_i32 = arith.constant 0 : i32
    %c0_i32_0 = arith.constant 0 : i32
    return %arg0, %c0_i32, %arg1 : i32, i32, i32
  }
  func.func @transform_1(%arg0: i32, %arg1: i32) -> (i32, i32) {
    %c0_i32 = arith.constant 0 : i32
    %c0_i32_0 = arith.constant 0 : i32
    %c0_i32_1 = arith.constant 0 : i32
    return %c0_i32, %c0_i32_0 : i32, i32
  }
  func.func @transform_2(%arg0: i32, %arg1: i32) -> (i32, i32, i32) {
    %c0_i32 = arith.constant 0 : i32
    %c0_i32_0 = arith.constant 0 : i32
    %c0_i32_1 = arith.constant 0 : i32
    return %arg0, %c0_i32, %c0_i32_0 : i32, i32, i32
  }
  func.func @transform_3(%arg0: i32, %arg1: i32) -> (i32, i32, i32) {
    %c0_i32 = arith.constant 0 : i32
    %c0_i32_0 = arith.constant 0 : i32
    %c0_i32_1 = arith.constant 0 : i32
    return %arg0, %c0_i32, %c0_i32_0 : i32, i32, i32
  }
}

</mosaic_0001>

<llo_original>
// kernel: tpu_custom_call.1
$region0: #{tpu_custom_call.1}
  #allocation0 [shape = 'u32[]', space=smem, size = 0x4, offset = 0x4, fixed_abs, tag = 'smem constant byte address 0x4 - core index']
  #allocation1 [shape = 'u32[144,128]{1,0:T(1,128)}', space=vmem, size = 0x12000, scoped, tag = 'internal scratch']
  %s0 = inlined_call_operand.vmem [shape: f32[2,4,256], index: 0, kind: input, shape index: {}]
  %s1 = inlined_call_operand.vmem [shape: f32[32,4], index: 1, kind: input, shape index: {}]
  %s2 = inlined_call_operand.vmem [shape: f32[2,32,1], index: 2, kind: output, shape index: {0}]
  %s3 = inlined_call_operand.vmem [shape: f32[2,32,1], index: 3, kind: output, shape index: {1}]
  %4 = xla_tuple %s2, %s3
  %s5 = sld [smem:[#allocation0]]
  $region53: #{tpu_custom_call.1} parent=0
    _
  %s7 = ssub.s32 1, %s5
  %s8 = scalar_select 0, %s7, %s5
  loop: start=0, step=1, limit=4
  $region2: #{tpu_custom_call.1} parent=0 // loop_pre_header
    _
  $region3: #{tpu_custom_call.1} parent=0 // loop_header
    %s10 = sphi 0, %s14
    %p11 = scmp.ge.s32.totalorder %s10, 4
    %s17 = sphi 0, %s29
    %s18 = sphi 0, %s25
    %s19 = sphi 0, %s17
    %s20 = sphi 0, %s18
    %s21 = sphi 0, %s19
    %s22 = sphi 0, %s20
    %s34 = sphi 0, %s36
    %s37 = sphi 0, %s34
    %s38 = sphi 0, %s37
    %s54 = sphi 0, %s38
    %s58 = sphi 0, %s58
    %s60 = sphi 0, %s58
    %s61 = sphi 0, %s60
    %s75 = sphi 0, %s61
    %s81 = sphi 0, %s83
    %s84 = sphi 0, %s81
    %s85 = sphi 0, %s84
    %s101 = sphi 0, %s85
    %s107 = sphi 0, %s109
    %s110 = sphi 0, %s107
    %s111 = sphi 0, %s110
    %s127 = sphi 0, %s111
  $region4: #{tpu_custom_call.1} parent=0 // loop_header_branch
    %13 = sbr.rel (%p11) target = $region8
  $region5: #{tpu_custom_call.1} parent=0 // loop_body
    %s15 = ssub.s32 %s10, 1
    %s16 = ssub.s32 %s10, 2
    %s23 = sadd.s32 1, %s18
    %p24 = scmp.ge.s32.totalorder %s23, 1
    %s25 = scalar_select %p24, 0, %s23
    %s26 = sadd.s32 1, %s17
    %s27 = scalar_select %p24, %s26, %s17
    %p28 = scmp.ge.s32.totalorder %s27, 2
    %s29 = scalar_select %p28, 0, %s27
    %s30 = ssub.s32 %s17, %s29
    %s31 = ssub.s32 %s18, %s25
    %s32 = sor.u32 %s30, %s31
    %p33 = scmp.eq.s32.totalorder %s32, 0
    %s35 = sadd.s32 %s34, 1
    %s36 = scalar_select %p33, %s34, %s35
    %p39 = pneg %p33
    %p40 = scmp.eq.s32.totalorder %s10, 1
    %p41 = por %p39, %p40
    %p42 = scmp.ne.s32.totalorder %s34, %s37
    %p43 = scmp.eq.s32.totalorder %s10, 0
    %p44 = por %p42, %p43
    %p45 = scmp.ne.s32.totalorder %s34, %s37
    %p46 = scmp.eq.s32.totalorder %s15, 1
    %p47 = por %p45, %p46
    %p48 = scmp.ne.s32.totalorder %s37, %s38
    %p49 = scmp.eq.s32.totalorder %s15, 0
    %p50 = por %p48, %p49
    %p51 = scmp.ne.s32.totalorder %s37, %s38
    %p52 = scmp.eq.s32.totalorder %s16, 1
    %p53 = por %p51, %p52
    %p55 = scmp.ne.s32.totalorder %s38, %s54
    %p56 = scmp.eq.s32.totalorder %s16, 0
    %p57 = por %p55, %p56
    %s59 = sadd.s32 %s58, 1
    %p62 = scmp.eq.s32.totalorder %s10, 1
    %p63 = scmp.ne.s32.totalorder %s58, %s60
    %p64 = scmp.eq.s32.totalorder %s10, 0
    %p65 = por %p63, %p64
    %p66 = scmp.ne.s32.totalorder %s58, %s60
    %p67 = scmp.eq.s32.totalorder %s15, 1
    %p68 = por %p66, %p67
    %p69 = scmp.ne.s32.totalorder %s60, %s61
    %p70 = scmp.eq.s32.totalorder %s15, 0
    %p71 = por %p69, %p70
    %p72 = scmp.ne.s32.totalorder %s60, %s61
    %p73 = scmp.eq.s32.totalorder %s16, 1
    %p74 = por %p72, %p73
    %p76 = scmp.ne.s32.totalorder %s61, %s75
    %p77 = scmp.eq.s32.totalorder %s16, 0
    %p78 = por %p76, %p77
    %s79 = ssub.s32 %s17, %s29
    %p80 = scmp.eq.s32.totalorder %s79, 0
    %s82 = sadd.s32 %s81, 1
    %s83 = scalar_select %p80, %s81, %s82
    %p86 = pneg %p80
    %p87 = scmp.eq.s32.totalorder %s10, 1
    %p88 = por %p86, %p87
    %p89 = scmp.ne.s32.totalorder %s81, %s84
    %p90 = scmp.eq.s32.totalorder %s10, 0
    %p91 = por %p89, %p90
    %p92 = scmp.ne.s32.totalorder %s81, %s84
    %p93 = scmp.eq.s32.totalorder %s15, 1
    %p94 = por %p92, %p93
    %p95 = scmp.ne.s32.totalorder %s84, %s85
    %p96 = scmp.eq.s32.totalorder %s15, 0
    %p97 = por %p95, %p96
    %p98 = scmp.ne.s32.totalorder %s84, %s85
    %p99 = scmp.eq.s32.totalorder %s16, 1
    %p100 = por %p98, %p99
    %p102 = scmp.ne.s32.totalorder %s85, %s101
    %p103 = scmp.eq.s32.totalorder %s16, 0
    %p104 = por %p102, %p103
    %s105 = ssub.s32 %s17, %s29
    %p106 = scmp.eq.s32.totalorder %s105, 0
    %s108 = sadd.s32 %s107, 1
    %s109 = scalar_select %p106, %s107, %s108
    %p112 = pneg %p106
    %p113 = scmp.eq.s32.totalorder %s10, 1
    %p114 = por %p112, %p113
    %p115 = scmp.ne.s32.totalorder %s107, %s110
    %p116 = scmp.eq.s32.totalorder %s10, 0
    %p117 = por %p115, %p116
    %p118 = scmp.ne.s32.totalorder %s107, %s110
    %p119 = scmp.eq.s32.totalorder %s15, 1
    %p120 = por %p118, %p119
    %p121 = scmp.ne.s32.totalorder %s110, %s111
    %p122 = scmp.eq.s32.totalorder %s15, 0
    %p123 = por %p121, %p122
    %p124 = scmp.ne.s32.totalorder %s110, %s111
    %p125 = scmp.eq.s32.totalorder %s16, 1
    %p126 = por %p124, %p125
    %p128 = scmp.ne.s32.totalorder %s111, %s127
    %p129 = scmp.eq.s32.totalorder %s16, 0
    %p130 = por %p128, %p129
    %p131 = scmp.le.s32.totalorder 1, %s10
    %p132 = scmp.lt.s32.totalorder %s10, 3
    %p133 = pnand %p131, %p132
    %p134 = pneg %p133
    // Predicated region
    $region9: #{tpu_custom_call.1} parent=5 // pred_check
      _
    $region10: #{tpu_custom_call.1} parent=5 // pred_check_branch
      %136 = sbr.rel (%p133) target = $region12
    $region11: #{tpu_custom_call.1} parent=5 // pred_region
      %s137 = ssub.s32 %s10, 1
      // Predicated region
      $region13: #{tpu_custom_call.1} parent=11 // pred_check
        %p138 = pneg %p71
      $region14: #{tpu_custom_call.1} parent=11 // pred_check_branch
        %140 = sbr.rel (%p138) target = $region16
      $region15: #{tpu_custom_call.1} parent=11 // pred_region
        _
      $region16: #{tpu_custom_call.1} parent=11 // pred_fallthru
        _
    $region12: #{tpu_custom_call.1} parent=5 // pred_fallthru
      _
    %p141 = scmp.lt.s32.totalorder %s10, 2
    // Predicated region
    $region17: #{tpu_custom_call.1} parent=5 // pred_check
      %p142 = pneg %p141
    $region18: #{tpu_custom_call.1} parent=5 // pred_check_branch
      %144 = sbr.rel (%p142) target = $region20
    $region19: #{tpu_custom_call.1} parent=5 // pred_region
      // Predicated region
      $region21: #{tpu_custom_call.1} parent=19 // pred_check
        %p145 = pneg %p44
      $region22: #{tpu_custom_call.1} parent=19 // pred_check_branch
        %147 = sbr.rel (%p145) target = $region24
      $region23: #{tpu_custom_call.1} parent=19 // pred_region
        %s148 = smul.u32 2, %s18
        %p149 = scmp.lt.s32.totalorder %s17, 1
        %s150 = scalar_select %p149, %s17, 1
        %p151 = scmp.lt.s32.totalorder %s148, 1
        %s152 = scalar_select %p151, %s148, 1
        %s153 = smul.addr %s150, 2
        %s154 = sadd.s32 %s152, %s153
        %s155 = smul.addr %s154, 4
        %s156 = scalar_lea.vmem %s0, %s155
        %s157 = smul.u32 2, %s18
      $region24: #{tpu_custom_call.1} parent=19 // pred_fallthru
        _
    $region20: #{tpu_custom_call.1} parent=5 // pred_fallthru
      _
    %p158 = scmp.le.s32.totalorder 1, %s10
    %p159 = scmp.lt.s32.totalorder %s10, 3
    %p160 = pnand %p158, %p159
    %p161 = pneg %p160
    // Predicated region
    $region25: #{tpu_custom_call.1} parent=5 // pred_check
      _
    $region26: #{tpu_custom_call.1} parent=5 // pred_check_branch
      %163 = sbr.rel (%p160) target = $region28
    $region27: #{tpu_custom_call.1} parent=5 // pred_region
      %s164 = ssub.s32 %s10, 1
      %s165 = smul.u32 2, %s20
      %p166 = scmp.lt.s32.totalorder %s19, 1
      %s167 = scalar_select %p166, %s19, 1
      %p168 = scmp.lt.s32.totalorder %s165, 1
      %s169 = scalar_select %p168, %s165, 1
      %s170 = smul.addr %s167, 2
      %s171 = sadd.s32 %s169, %s170
      %s172 = smul.addr %s171, 4
      %s173 = scalar_lea.vmem %s0, %s172
      %p174 = pneg %p50
      %p175 = pneg %p47
      %p176 = pneg %p71
      %p177 = pneg %p68
      %p178 = pneg %p97
      %p179 = pneg %p94
      %p180 = scmp.lt.s32.totalorder %s19, 1
      %s181 = scalar_select %p180, %s19, 1
      %s182 = smul.addr %s181, 4
      %s183 = smul.addr %s182, 8
      %s184 = scalar_lea.vmem %s2, %s183
      %p185 = pneg %p123
      %p186 = pneg %p120
      %p187 = scmp.lt.s32.totalorder %s19, 1
      %s188 = scalar_select %p187, %s19, 1
      %s189 = smul.addr %s188, 4
      %s190 = smul.addr %s189, 8
      %s191 = scalar_lea.vmem %s3, %s190
      %s192 = smul.u32 2, %s20
      %p193 = scmp.lt.s32.totalorder %s19, 1
      %s194 = scalar_select %p193, %s19, 1
      %p195 = scmp.lt.s32.totalorder %s192, 1
      %s196 = scalar_select %p195, %s192, 1
      %s197 = smul.addr %s194, 2
      %s198 = sadd.s32 %s196, %s197
      %s199 = smul.addr %s198, 4
      %s200 = scalar_lea.vmem %s0, %s199
      %s201 = smul.u32 2, %s20
      %p202 = scmp.lt.s32.totalorder %s19, 1
      %s203 = scalar_select %p202, %s19, 1
      %s204 = smul.addr %s203, 4
      %s205 = smul.addr %s204, 8
      %s206 = scalar_lea.vmem %s2, %s205
      %p207 = scmp.lt.s32.totalorder %s19, 1
      %s208 = scalar_select %p207, %s19, 1
      %s209 = smul.addr %s208, 4
      %s210 = smul.addr %s209, 8
      %s211 = scalar_lea.vmem %s3, %s210
      %p212 = scmp.eq.s32.totalorder %s20, 0
      // Predicated region
      $region29: #{tpu_custom_call.1} parent=27 // pred_check
        %p213 = pneg %p212
      $region30: #{tpu_custom_call.1} parent=27 // pred_check_branch
        %215 = sbr.rel (%p213) target = $region32
      $region31: #{tpu_custom_call.1} parent=27 // pred_region
        %vm216 = vcmask 7168
        %217 = vst.msk [vmem:[%s206] sm:$0xff] %vm216, 0.0
        %218 = vst.msk [vmem:[%s206 + $0x8] sm:$0xff] %vm216, 0.0
        %219 = vst.msk [vmem:[%s206 + $0x10] sm:$0xff] %vm216, 0.0
        %220 = vst.msk [vmem:[%s206 + $0x18] sm:$0xff] %vm216, 0.0
        %221 = vst.msk [vmem:[%s211] sm:$0xff] %vm216, 0.0
        %222 = vst.msk [vmem:[%s211 + $0x8] sm:$0xff] %vm216, 0.0
        %223 = vst.msk [vmem:[%s211 + $0x10] sm:$0xff] %vm216, 0.0
        %224 = vst.msk [vmem:[%s211 + $0x18] sm:$0xff] %vm216, 0.0
      $region32: #{tpu_custom_call.1} parent=27 // pred_fallthru
        _
      %v225 = vld [vmem:[%s200] sm:$0xff]
      %v226 = vld [vmem:[%s1] sm:$0xff]
      %v227 = vld [vmem:[%s1 + $0x8] sm:$0xff]
      %v228 = vld [vmem:[%s1 + $0x10] sm:$0xff]
      %v229 = vld [vmem:[%s1 + $0x18] sm:$0xff]
      %231 = vset.pattern.permute.xlu0 0
      %232 = vperm.xlu0 %231, %v226
      %v233 = vpop.permute.xlu0 %232
      %236 = vset.pattern.permute.xlu0 0
      %237 = vperm.xlu0 %236, %v227
      %v238 = vpop.permute.xlu0 %237
      %241 = vset.pattern.permute.xlu0 0
      %242 = vperm.xlu0 %241, %v228
      %v243 = vpop.permute.xlu0 %242
      %246 = vset.pattern.permute.xlu0 0
      %247 = vperm.xlu0 %246, %v229
      %v248 = vpop.permute.xlu0 %247
      %v251 = vlaneseq
      %v252 = vshrl.u32 %v251, 7
      %v253 = vsub.s32 0, %v252
      %v254 = vrot.slane %v225, %v253
      %v255 = vlaneseq
      %v256 = vshrl.u32 %v255, 7
      %v257 = vsub.s32 4, %v256
      %v258 = vrot.slane %v225, %v257
      %v261 = vlaneseq
      %v262 = vshrl.u32 %v261, 7
      %v263 = vsub.s32 0, %v262
      %v264 = vrot.slane %v254, %v263
      %v265 = vlaneseq
      %v266 = vshrl.u32 %v265, 7
      %v267 = vsub.s32 0, %v266
      %v268 = vrot.slane %v258, %v267
      %v269 = vmul.f32 %v233, %v264
      %v270 = vmul.f32 %v233, %v268
      %v271 = vmul.f32 %v238, %v264
      %v272 = vmul.f32 %v238, %v268
      %v273 = vmul.f32 %v243, %v264
      %v274 = vmul.f32 %v243, %v268
      %v275 = vmul.f32 %v248, %v264
      %v276 = vmul.f32 %v248, %v268
      %277 = vset.pattern.permute.xlu0 1
      %278 = vperm.xlu0 %277, %v226
      %v279 = vpop.permute.xlu0 %278
      %281 = vset.pattern.permute.xlu0 1
      %282 = vperm.xlu0 %281, %v227
      %v283 = vpop.permute.xlu0 %282
      %285 = vset.pattern.permute.xlu0 1
      %286 = vperm.xlu0 %285, %v228
      %v287 = vpop.permute.xlu0 %286
      %289 = vset.pattern.permute.xlu0 1
      %290 = vperm.xlu0 %289, %v229
      %v291 = vpop.permute.xlu0 %290
      %v293 = vlaneseq
      %v294 = vshrl.u32 %v293, 7
      %v295 = vsub.s32 1, %v294
      %v296 = vrot.slane %v225, %v295
      %v297 = vlaneseq
      %v298 = vshrl.u32 %v297, 7
      %v299 = vsub.s32 5, %v298
      %v300 = vrot.slane %v225, %v299
      %v303 = vlaneseq
      %v304 = vshrl.u32 %v303, 7
      %v305 = vsub.s32 1, %v304
      %v306 = vrot.slane %v296, %v305
      %v307 = vlaneseq
      %v308 = vshrl.u32 %v307, 7
      %v309 = vsub.s32 1, %v308
      %v310 = vrot.slane %v300, %v309
      %v311 = vmul.f32 %v279, %v306
      %v312 = vmul.f32 %v279, %v310
      %v313 = vmul.f32 %v283, %v306
      %v314 = vmul.f32 %v283, %v310
      %v315 = vmul.f32 %v287, %v306
      %v316 = vmul.f32 %v287, %v310
      %v317 = vmul.f32 %v291, %v306
      %v318 = vmul.f32 %v291, %v310
      %v319 = vadd.f32 %v269, %v311
      %v320 = vadd.f32 %v270, %v312
      %v321 = vadd.f32 %v271, %v313
      %v322 = vadd.f32 %v272, %v314
      %v323 = vadd.f32 %v273, %v315
      %v324 = vadd.f32 %v274, %v316
      %v325 = vadd.f32 %v275, %v317
      %v326 = vadd.f32 %v276, %v318
      %327 = vset.pattern.permute.xlu0 2
      %328 = vperm.xlu0 %327, %v226
      %v329 = vpop.permute.xlu0 %328
      %331 = vset.pattern.permute.xlu0 2
      %332 = vperm.xlu0 %331, %v227
      %v333 = vpop.permute.xlu0 %332
      %335 = vset.pattern.permute.xlu0 2
      %336 = vperm.xlu0 %335, %v228
      %v337 = vpop.permute.xlu0 %336
      %339 = vset.pattern.permute.xlu0 2
      %340 = vperm.xlu0 %339, %v229
      %v341 = vpop.permute.xlu0 %340
      %v343 = vlaneseq
      %v344 = vshrl.u32 %v343, 7
      %v345 = vsub.s32 2, %v344
      %v346 = vrot.slane %v225, %v345
      %v347 = vlaneseq
      %v348 = vshrl.u32 %v347, 7
      %v349 = vsub.s32 6, %v348
      %v350 = vrot.slane %v225, %v349
      %v353 = vlaneseq
      %v354 = vshrl.u32 %v353, 7
      %v355 = vsub.s32 2, %v354
      %v356 = vrot.slane %v346, %v355
      %v357 = vlaneseq
      %v358 = vshrl.u32 %v357, 7
      %v359 = vsub.s32 2, %v358
      %v360 = vrot.slane %v350, %v359
      %v361 = vmul.f32 %v329, %v356
      %v362 = vmul.f32 %v329, %v360
      %v363 = vmul.f32 %v333, %v356
      %v364 = vmul.f32 %v333, %v360
      %v365 = vmul.f32 %v337, %v356
      %v366 = vmul.f32 %v337, %v360
      %v367 = vmul.f32 %v341, %v356
      %v368 = vmul.f32 %v341, %v360
      %v369 = vadd.f32 %v319, %v361
      %v370 = vadd.f32 %v320, %v362
      %v371 = vadd.f32 %v321, %v363
      %v372 = vadd.f32 %v322, %v364
      %v373 = vadd.f32 %v323, %v365
      %v374 = vadd.f32 %v324, %v366
      %v375 = vadd.f32 %v325, %v367
      %v376 = vadd.f32 %v326, %v368
      %377 = vset.pattern.permute.xlu0 3
      %378 = vperm.xlu0 %377, %v226
      %v379 = vpop.permute.xlu0 %378
      %381 = vset.pattern.permute.xlu0 3
      %382 = vperm.xlu0 %381, %v227
      %v383 = vpop.permute.xlu0 %382
      %385 = vset.pattern.permute.xlu0 3
      %386 = vperm.xlu0 %385, %v228
      %v387 = vpop.permute.xlu0 %386
      %389 = vset.pattern.permute.xlu0 3
      %390 = vperm.xlu0 %389, %v229
      %v391 = vpop.permute.xlu0 %390
      %v393 = vlaneseq
      %v394 = vshrl.u32 %v393, 7
      %v395 = vsub.s32 3, %v394
      %v396 = vrot.slane %v225, %v395
      %v397 = vlaneseq
      %v398 = vshrl.u32 %v397, 7
      %v399 = vsub.s32 7, %v398
      %v400 = vrot.slane %v225, %v399
      %v403 = vlaneseq
      %v404 = vshrl.u32 %v403, 7
      %v405 = vsub.s32 3, %v404
      %v406 = vrot.slane %v396, %v405
      %v407 = vlaneseq
      %v408 = vshrl.u32 %v407, 7
      %v409 = vsub.s32 3, %v408
      %v410 = vrot.slane %v400, %v409
      %v411 = vmul.f32 %v379, %v406
      %v412 = vmul.f32 %v379, %v410
      %v413 = vmul.f32 %v383, %v406
      %v414 = vmul.f32 %v383, %v410
      %v415 = vmul.f32 %v387, %v406
      %v416 = vmul.f32 %v387, %v410
      %v417 = vmul.f32 %v391, %v406
      %v418 = vmul.f32 %v391, %v410
      %v419 = vadd.f32 %v369, %v411
      %v420 = vadd.f32 %v370, %v412
      %v421 = vadd.f32 %v371, %v413
      %v422 = vadd.f32 %v372, %v414
      %v423 = vadd.f32 %v373, %v415
      %v424 = vadd.f32 %v374, %v416
      %v425 = vadd.f32 %v375, %v417
      %v426 = vadd.f32 %v376, %v418
      %v427 = vld [vmem:[%s206] sm:$0xff]
      %v428 = vld [vmem:[%s206 + $0x8] sm:$0xff]
      %v429 = vld [vmem:[%s206 + $0x10] sm:$0xff]
      %v430 = vld [vmem:[%s206 + $0x18] sm:$0xff]
      %v431 = vadd.f32 %v419, %v420
      %432 = vadd.xlane.f32.xlu0 %v431
      %v433 = vpop.xlane.xlu0 %432
      %v434 = vadd.f32 %v421, %v422
      %435 = vadd.xlane.f32.xlu0 %v434
      %v436 = vpop.xlane.xlu0 %435
      %v437 = vadd.f32 %v423, %v424
      %438 = vadd.xlane.f32.xlu0 %v437
      %v439 = vpop.xlane.xlu0 %438
      %v440 = vadd.f32 %v425, %v426
      %441 = vadd.xlane.f32.xlu0 %v440
      %v442 = vpop.xlane.xlu0 %441
      %v443 = vadd.f32 %v427, %v433
      %v444 = vadd.f32 %v428, %v436
      %v445 = vadd.f32 %v429, %v439
      %v446 = vadd.f32 %v430, %v442
      %vm447 = vcmask 7168
      %448 = vst.msk [vmem:[%s206] sm:$0xff] %vm447, %v443
      %449 = vst.msk [vmem:[%s206 + $0x8] sm:$0xff] %vm447, %v444
      %450 = vst.msk [vmem:[%s206 + $0x10] sm:$0xff] %vm447, %v445
      %451 = vst.msk [vmem:[%s206 + $0x18] sm:$0xff] %vm447, %v446
      %v452 = vld [vmem:[%s211] sm:$0xff]
      %v453 = vld [vmem:[%s211 + $0x8] sm:$0xff]
      %v454 = vld [vmem:[%s211 + $0x10] sm:$0xff]
      %v455 = vld [vmem:[%s211 + $0x18] sm:$0xff]
      %v456 = vmul.f32 %v419, %v419
      %v457 = vmul.f32 %v420, %v420
      %v458 = vmul.f32 %v421, %v421
      %v459 = vmul.f32 %v422, %v422
      %v460 = vmul.f32 %v423, %v423
      %v461 = vmul.f32 %v424, %v424
      %v462 = vmul.f32 %v425, %v425
      %v463 = vmul.f32 %v426, %v426
      %v464 = vadd.f32 %v456, %v457
      %465 = vadd.xlane.f32.xlu0 %v464
      %v466 = vpop.xlane.xlu0 %465
      %v467 = vadd.f32 %v458, %v459
      %468 = vadd.xlane.f32.xlu0 %v467
      %v469 = vpop.xlane.xlu0 %468
      %v470 = vadd.f32 %v460, %v461
      %471 = vadd.xlane.f32.xlu0 %v470
      %v472 = vpop.xlane.xlu0 %471
      %v473 = vadd.f32 %v462, %v463
      %474 = vadd.xlane.f32.xlu0 %v473
      %v475 = vpop.xlane.xlu0 %474
      %v476 = vadd.f32 %v452, %v466
      %v477 = vadd.f32 %v453, %v469
      %v478 = vadd.f32 %v454, %v472
      %v479 = vadd.f32 %v455, %v475
      %480 = vst.msk [vmem:[%s211] sm:$0xff] %vm447, %v476
      %481 = vst.msk [vmem:[%s211 + $0x8] sm:$0xff] %vm447, %v477
      %482 = vst.msk [vmem:[%s211 + $0x10] sm:$0xff] %vm447, %v478
      %483 = vst.msk [vmem:[%s211 + $0x18] sm:$0xff] %vm447, %v479
      %p484 = scmp.lt.s32.totalorder %s19, 1
      %s485 = scalar_select %p484, %s19, 1
      %s486 = smul.addr %s485, 4
      %s487 = smul.addr %s486, 8
      %s488 = scalar_lea.vmem %s2, %s487
      %p489 = scmp.lt.s32.totalorder %s19, 1
      %s490 = scalar_select %p489, %s19, 1
      %s491 = smul.addr %s490, 4
      %s492 = smul.addr %s491, 8
      %s493 = scalar_lea.vmem %s3, %s492
      // Predicated region
      $region33: #{tpu_custom_call.1} parent=27 // pred_check
        %p494 = pneg %p94
      $region34: #{tpu_custom_call.1} parent=27 // pred_check_branch
        %496 = sbr.rel (%p494) target = $region36
      $region35: #{tpu_custom_call.1} parent=27 // pred_region
        _
      $region36: #{tpu_custom_call.1} parent=27 // pred_fallthru
        _
      // Predicated region
      $region37: #{tpu_custom_call.1} parent=27 // pred_check
        %p497 = pneg %p120
      $region38: #{tpu_custom_call.1} parent=27 // pred_check_branch
        %499 = sbr.rel (%p497) target = $region40
      $region39: #{tpu_custom_call.1} parent=27 // pred_region
        _
      $region40: #{tpu_custom_call.1} parent=27 // pred_fallthru
        _
    $region28: #{tpu_custom_call.1} parent=5 // pred_fallthru
      _
    %p500 = scmp.le.s32.totalorder 2, %s10
    // Predicated region
    $region41: #{tpu_custom_call.1} parent=5 // pred_check
      %p501 = pneg %p500
    $region42: #{tpu_custom_call.1} parent=5 // pred_check_branch
      %503 = sbr.rel (%p501) target = $region44
    $region43: #{tpu_custom_call.1} parent=5 // pred_region
      %s504 = ssub.s32 %s10, 2
      // Predicated region
      $region45: #{tpu_custom_call.1} parent=43 // pred_check
        %p505 = pneg %p100
      $region46: #{tpu_custom_call.1} parent=43 // pred_check_branch
        %507 = sbr.rel (%p505) target = $region48
      $region47: #{tpu_custom_call.1} parent=43 // pred_region
        %p508 = scmp.lt.s32.totalorder %s21, 1
        %s509 = scalar_select %p508, %s21, 1
        %s510 = smul.addr %s509, 4
        %s511 = smul.addr %s510, 8
        %s512 = scalar_lea.vmem %s2, %s511
      $region48: #{tpu_custom_call.1} parent=43 // pred_fallthru
        _
      // Predicated region
      $region49: #{tpu_custom_call.1} parent=43 // pred_check
        %p513 = pneg %p126
      $region50: #{tpu_custom_call.1} parent=43 // pred_check_branch
        %515 = sbr.rel (%p513) target = $region52
      $region51: #{tpu_custom_call.1} parent=43 // pred_region
        %p516 = scmp.lt.s32.totalorder %s21, 1
        %s517 = scalar_select %p516, %s21, 1
        %s518 = smul.addr %s517, 4
        %s519 = smul.addr %s518, 8
        %s520 = scalar_lea.vmem %s3, %s519
      $region52: #{tpu_custom_call.1} parent=43 // pred_fallthru
        _
    $region44: #{tpu_custom_call.1} parent=5 // pred_fallthru
      _
  $region6: #{tpu_custom_call.1} parent=0 // loop_footer
    %s14 = sadd.s32 1, %s10
  $region7: #{tpu_custom_call.1} parent=0 // loop_footer_branch
    %9 = sbr.rel target = $region3
  $region8: #{tpu_custom_call.1} parent=0 // loop_exit
    _

</llo_original>
